<compile_context>
chip_gen: v7x
topology: tpu7x:2x2x1
jax: 0.10.0
libtpu: 0.0.40
codegen_flags: <defaults>
</compile_context>

<pallas_src>
import functools
from typing import NamedTuple

import jax
import jax.numpy as jnp
from jax.experimental import pallas as pl
from jax.experimental.pallas import tpu as pltpu

LN_EPS = 1e-5   # PyTorch nn.LayerNorm default eps
LANE = 128      # TPU lane width


def _round_up(n, m):
    return ((n + m - 1) // m) * m


def _ceil_div(a, b):
    return -(-a // b)


def _ln_normalize(h, n_real):
    """LayerNorm (no affine), single reduction pass over the lane-padded width.

    `h` must be exactly zero in the padded lanes beyond the first `n_real`
    features (guaranteed by zero-padded weights/biases + ReLU), so sums over the
    padded width equal sums over the real features; divide by the real count.
    Variance is clamped >= 0: E[x^2]-E[x]^2 can cancel slightly negative in f32.
    """
    inv_n = 1.0 / float(n_real)
    s = jnp.sum(h, axis=-1, keepdims=True)
    s2 = jnp.sum(h * h, axis=-1, keepdims=True)
    mu = s * inv_n
    var = jnp.maximum(s2 * inv_n - mu * mu, 0.0)
    return (h - mu) * jax.lax.rsqrt(var + LN_EPS)


def actor_net_kernel(x_ref, w1_ref, w2_ref, w3_ref, vec_ref, o_ref, *, h1, h2):
    mxu_dtype = w1_ref.dtype           # f32, or bf16 if prepared with use_bf16_matmul
    p1 = w1_ref.shape[1]
    p2 = w2_ref.shape[1]
    pa = w3_ref.shape[1]

    # Packed per-layer row vectors (static slices of the [4, Pmax] pack).
    b1 = vec_ref[0:1, 0:p1]
    b2 = vec_ref[1:2, 0:p2]
    b3 = vec_ref[2:3, 0:pa]
    ab = vec_ref[3:4, 0:pa]

    x = x_ref[...]                      # already mxu_dtype (cast in the wrapper)

    # ---- Linear 1 + ReLU + LayerNorm (affine folded into W2/b2) ------------
    h = jnp.dot(x, w1_ref[...], preferred_element_type=jnp.float32) + b1
    h = jnp.maximum(h, 0.0)
    h = _ln_normalize(h, h1)

    # ---- Linear 2 + ReLU + LayerNorm (affine folded into W3/b3) ------------
    h = jnp.dot(h.astype(mxu_dtype), w2_ref[...],
                preferred_element_type=jnp.float32) + b2
    h = jnp.maximum(h, 0.0)
    h = _ln_normalize(h, h2)

    # ---- Linear 3 + Dropout(eval: identity) + Tanh + action_bound ----------
    h = jnp.dot(h.astype(mxu_dtype), w3_ref[...],
                preferred_element_type=jnp.float32) + b3
    o_ref[...] = (jnp.tanh(h) * ab).astype(o_ref.dtype)


class PreparedActorParams(NamedTuple):
    w1: jax.Array    # [Sp, P1]
    w2: jax.Array    # [P1, P2]  (LN1 affine folded in)
    w3: jax.Array    # [P2, Pa]  (LN2 affine folded in)
    vec: jax.Array   # [4, Pmax] rows: b1, b2_folded, b3_folded, action_bound


def prepare_actor_params(params, action_bound=None, *, use_bf16_matmul=False):
    """One-time (load-time) prep, hoisted out of the per-call forward path.

    Folds LN affine into the next Linear, zero-pads every feature dim
    independently to the 128-lane width, packs the four small per-layer vectors
    into one [4, Pmax] array, and optionally casts the weights to bf16.

    NOTE: the zero padding is what makes the in-kernel padded-lane math exact —
    padded weight rows/cols and bias entries are 0, so padded activations are 0
    entering every matmul and LN statistics can divide by the real feature count.
    """
    S, H1 = params["w1"].shape
    H2 = params["w2"].shape[1]
    A = params["w3"].shape[1]

    # LN(h)@W + b = norm(h)@(gamma[:,None]*W) + (beta@W + b)
    w2f = params["g1"][:, None] * params["w2"]
    b2f = params["be1"] @ params["w2"] + params["b2"]
    w3f = params["g2"][:, None] * params["w3"]
    b3f = params["be2"] @ params["w3"] + params["b3"]

    ab = (jnp.ones((A,), jnp.float32) if action_bound is None
          else jnp.asarray(action_bound, jnp.float32))

    Sp = _round_up(S, LANE)
    P1 = _round_up(H1, LANE)
    P2 = _round_up(H2, LANE)
    Pa = _round_up(A, LANE)
    Pmax = max(P1, P2, Pa)

    def pad2(w, r, c):
        w = w.astype(jnp.float32)
        return jnp.pad(w, ((0, r - w.shape[0]), (0, c - w.shape[1])))

    def pad1(v, n):
        return jnp.pad(v.astype(jnp.float32), (0, n - v.shape[0]))

    w1p = pad2(params["w1"], Sp, P1)
    w2p = pad2(w2f, P1, P2)
    w3p = pad2(w3f, P2, Pa)
    vec = jnp.stack([pad1(params["b1"], Pmax), pad1(b2f, Pmax),
                     pad1(b3f, Pmax), pad1(ab, Pmax)])          # [4, Pmax] f32

    wdt = jnp.bfloat16 if use_bf16_matmul else jnp.float32
    prep = PreparedActorParams(w1p.astype(wdt), w2p.astype(wdt),
                               w3p.astype(wdt), vec)
    dims = (S, H1, H2, A)               # static real dims for the jitted forward
    return jax.device_put(prep), dims


def _choose_batch_tile(B, block_batch):
    if block_batch is not None:
        return _round_up(int(block_batch), 8)
    if B <= 64:
        return _round_up(B, 8)          # tiny batch: one step, splitting is pure overhead
    # ~512 rows/step for large B (amortizes ~0.35us/step), but keep >=2 grid
    # steps so both v7x TensorCores get a share of the "parallel" batch axis.
    n_steps = max(2, _ceil_div(B, 512))
    return _round_up(_ceil_div(B, n_steps), 8)


def _vmem_limit_bytes(TB, Sp, P1, P2, Pa, Pmax, x_bytes, w_bytes):
    stream = 2 * TB * (Sp * x_bytes + Pa * 4)                   # double-buffered x / out tiles
    resident = 2 * ((Sp * P1 + P1 * P2 + P2 * Pa) * w_bytes + 4 * Pmax * 4)
    need = int((stream + resident) * 1.25) + (1 << 20)
    return max(16 << 20, min(need, 128 << 20))


@functools.partial(jax.jit, static_argnames=("dims", "block_batch"))
def actor_net_forward(x, prep, dims, *, block_batch=None):
    """x: [B, state_size] f32; (prep, dims) from prepare_actor_params (load-time)."""
    S, H1, H2, A = dims
    B = x.shape[0]
    assert x.shape[1] == S
    Sp, P1 = prep.w1.shape
    P2 = prep.w2.shape[1]
    Pa = prep.w3.shape[1]
    Pmax = prep.vec.shape[1]
    mxu_dtype = prep.w1.dtype

    TB = _choose_batch_tile(B, block_batch)
    Bp = _round_up(B, TB)

    # Wrapper-side cast (bf16 mode halves the streamed x DMA bytes) + zero pad.
    xp = jnp.pad(x.astype(mxu_dtype), ((0, Bp - B), (0, Sp - S)))

    kernel = functools.partial(actor_net_kernel, h1=H1, h2=H2)
    vmem_limit = _vmem_limit_bytes(TB, Sp, P1, P2, Pa, Pmax,
                                   xp.dtype.itemsize, mxu_dtype.itemsize)

    out_padded = pl.pallas_call(
        kernel,
        out_shape=jax.ShapeDtypeStruct((Bp, Pa), jnp.float32),
        grid_spec=pltpu.PrefetchScalarGridSpec(
            num_scalar_prefetch=0,
            grid=(Bp // TB,),
            in_specs=[
                pl.BlockSpec((TB, Sp), lambda i: (i, 0)),     # x tile (pipelined DMA)
                # Constant block index -> weights stay VMEM-resident across steps.
                # TODO(synk): for very large hidden dims on v7x (64 MiB VMEM),
                # single-buffer these (pipeline_mode=pl.Buffered(1)) or stage them
                # once into scratch to halve the resident weight footprint.
                pl.BlockSpec((Sp, P1), lambda i: (0, 0)),     # W1
                pl.BlockSpec((P1, P2), lambda i: (0, 0)),     # W2' (LN1 folded)
                pl.BlockSpec((P2, Pa), lambda i: (0, 0)),     # W3' (LN2 folded)
                pl.BlockSpec((4, Pmax), lambda i: (0, 0)),    # packed b1/b2'/b3'/bound
            ],
            out_specs=pl.BlockSpec((TB, Pa), lambda i: (i, 0)),  # lane-dense output
        ),
        compiler_params=pltpu.CompilerParams(
            dimension_semantics=("parallel",),
            vmem_limit_bytes=vmem_limit,
        ),
    )(xp, prep.w1, prep.w2, prep.w3, prep.vec)

    return out_padded[:B, :A]


def init_params(key, state_size, action_size, n_hiddens1=20, n_hiddens2=20):
    """Deterministic synthetic init (stands in for uniform_params_initialization)."""
    ks = jax.random.split(key, 6)

    def unif(k, shape, fan_in):
        bound = 1.0 / jnp.sqrt(jnp.float32(fan_in))
        return jax.random.uniform(k, shape, jnp.float32, -bound, bound)

    return {
        # weights stored as [in, out] (transpose of torch nn.Linear.weight)
        "w1": unif(ks[0], (state_size, n_hiddens1), state_size),
        "b1": unif(ks[1], (n_hiddens1,), state_size),
        "g1": jnp.ones((n_hiddens1,), jnp.float32),    # LayerNorm weight
        "be1": jnp.zeros((n_hiddens1,), jnp.float32),  # LayerNorm bias
        "w2": unif(ks[2], (n_hiddens1, n_hiddens2), n_hiddens1),
        "b2": unif(ks[3], (n_hiddens2,), n_hiddens1),
        "g2": jnp.ones((n_hiddens2,), jnp.float32),
        "be2": jnp.zeros((n_hiddens2,), jnp.float32),
        "w3": unif(ks[4], (n_hiddens2, action_size), n_hiddens2),
        "b3": unif(ks[5], (action_size,), n_hiddens2),
    }


def _reference_forward(x, params, action_bound):
    """Pure-JAX reference of the same forward pass (for correctness check)."""
    def ln(h, g, b):
        mu = jnp.mean(h, axis=-1, keepdims=True)
        var = jnp.mean((h - mu) * (h - mu), axis=-1, keepdims=True)
        return (h - mu) * jax.lax.rsqrt(var + LN_EPS) * g + b

    h = x @ params["w1"] + params["b1"]
    h = jnp.maximum(h, 0.0)
    h = ln(h, params["g1"], params["be1"])
    h = h @ params["w2"] + params["b2"]
    h = jnp.maximum(h, 0.0)
    h = ln(h, params["g2"], params["be2"])
    h = h @ params["w3"] + params["b3"]
    return jnp.tanh(h) * action_bound


if __name__ == "__main__":
    key = jax.random.PRNGKey(0)
    k_x, k_p, k_x2 = jax.random.split(key, 3)

    batch = 32
    state_size = 16
    action_size = 4
    n_hiddens1 = 20
    n_hiddens2 = 20

    x = jax.random.normal(k_x, (batch, state_size), jnp.float32)
    params = init_params(k_p, state_size, action_size, n_hiddens1, n_hiddens2)
    action_bound = jnp.array([2.0, 1.0, 0.5, 3.0], jnp.float32)

    # One-time, load-time prep (LN-affine folding / padding / packing hoisted
    # out of the per-call forward path).
    prep, dims = prepare_actor_params(params, action_bound)

    # block_batch=8 forces a 4-step batch grid at this small size so the
    # pipelined x/out tiles and VMEM-resident weights are actually exercised.
    out = actor_net_forward(x, prep, dims, block_batch=8)
    out = jax.block_until_ready(out)
    ref = _reference_forward(x, params, action_bound)
    assert out.shape == (batch, action_size)
    assert jnp.allclose(out, ref, atol=1e-5, rtol=1e-5), "mismatch vs reference"

    # Larger, non-multiple batch through the default (adaptive TB, >=2-step) path.
    x2 = jax.random.normal(k_x2, (200, state_size), jnp.float32)
    out2 = jax.block_until_ready(actor_net_forward(x2, prep, dims))
    ref2 = _reference_forward(x2, params, action_bound)
    assert out2.shape == (200, action_size)
    assert jnp.allclose(out2, ref2, atol=1e-5, rtol=1e-5), "mismatch vs reference (B=200)"

    # bf16 MXU-operand variant (the main dtype lever on v6e/v7x): verify it
    # compiles, runs, and stays finite (looser numerics than the f32 reference).
    prep_bf16, dims_bf16 = prepare_actor_params(params, action_bound,
                                                use_bf16_matmul=True)
    out_bf16 = jax.block_until_ready(actor_net_forward(x, prep_bf16, dims_bf16))
    assert out_bf16.shape == (batch, action_size)
    assert bool(jnp.all(jnp.isfinite(out_bf16)))

    print("KERNEL_OK")
</pallas_src>

<mosaic_0001>
module attributes {stable_mosaic.version = 11 : i64} {
  func.func @actor_net_kernel(%arg0: i32, %arg1: memref<8x128xf32, #tpu.memory_space<vmem>>, %arg2: memref<128x128xf32, #tpu.memory_space<vmem>>, %arg3: memref<128x128xf32, #tpu.memory_space<vmem>>, %arg4: memref<128x128xf32, #tpu.memory_space<vmem>>, %arg5: memref<4x128xf32, #tpu.memory_space<vmem>>, %arg6: memref<8x128xf32, #tpu.memory_space<vmem>>) attributes {dimension_semantics = [#tpu.dimension_semantics<parallel>], iteration_bounds = array<i64: 4>, scalar_prefetch = 0 : i64, scratch_operands = 0 : i64, tpu.core_type = #tpu.core_type<tc>, window_params = [{transform_indices = @transform_0, window_bounds = array<i64: 8, 128>}, {pipeline_mode = #tpu.pipeline_mode<synchronous>, transform_indices = @transform_1, window_bounds = array<i64: 128, 128>}, {pipeline_mode = #tpu.pipeline_mode<synchronous>, transform_indices = @transform_2, window_bounds = array<i64: 128, 128>}, {pipeline_mode = #tpu.pipeline_mode<synchronous>, transform_indices = @transform_3, window_bounds = array<i64: 128, 128>}, {pipeline_mode = #tpu.pipeline_mode<synchronous>, transform_indices = @transform_4, window_bounds = array<i64: 4, 128>}, {transform_indices = @transform_5, window_bounds = array<i64: 8, 128>}]} {
    %c0 = arith.constant 0 : index
    %c0_0 = arith.constant 0 : index
    %0 = vector.load %arg5[%c0, %c0_0] : memref<4x128xf32, #tpu.memory_space<vmem>>, vector<1x128xf32>
    %c1 = arith.constant 1 : index
    %c0_1 = arith.constant 0 : index
    %1 = vector.load %arg5[%c1, %c0_1] : memref<4x128xf32, #tpu.memory_space<vmem>>, vector<1x128xf32>
    %c2 = arith.constant 2 : index
    %c0_2 = arith.constant 0 : index
    %2 = vector.load %arg5[%c2, %c0_2] : memref<4x128xf32, #tpu.memory_space<vmem>>, vector<1x128xf32>
    %c3 = arith.constant 3 : index
    %c0_3 = arith.constant 0 : index
    %3 = vector.load %arg5[%c3, %c0_3] : memref<4x128xf32, #tpu.memory_space<vmem>>, vector<1x128xf32>
    %c0_4 = arith.constant 0 : index
    %c0_5 = arith.constant 0 : index
    %4 = vector.load %arg1[%c0_4, %c0_5] : memref<8x128xf32, #tpu.memory_space<vmem>>, vector<8x128xf32>
    %c0_6 = arith.constant 0 : index
    %c0_7 = arith.constant 0 : index
    %5 = vector.load %arg2[%c0_6, %c0_7] : memref<128x128xf32, #tpu.memory_space<vmem>>, vector<128x128xf32>
    %cst = arith.constant dense<0.000000e+00> : vector<8x128xf32>
    %6 = tpu.matmul %4, %5, %cst {dimension_numbers = #tpu.dot_dimension_numbers<[1], [0], [0], [1], [0, 0, 1, 1], [], []>} : vector<8x128xf32>, vector<128x128xf32>, vector<8x128xf32> -> vector<8x128xf32>
    %7 = vector.broadcast %0 : vector<1x128xf32> to vector<8x128xf32>
    %8 = arith.addf %6, %7 : vector<8x128xf32>
    %cst_8 = arith.constant 0.000000e+00 : f32
    %9 = vector.broadcast %cst_8 : f32 to vector<8x128xf32>
    %10 = arith.maximumf %8, %9 : vector<8x128xf32>
    %cst_9 = arith.constant dense<0.000000e+00> : vector<8xf32>
    %11 = vector.multi_reduction <add>, %10, %cst_9 [1] : vector<8x128xf32> to vector<8xf32>
    %12 = vector.shape_cast %11 : vector<8xf32> to vector<8x1xf32>
    %13 = arith.mulf %10, %10 : vector<8x128xf32>
    %cst_10 = arith.constant dense<0.000000e+00> : vector<8xf32>
    %14 = vector.multi_reduction <add>, %13, %cst_10 [1] : vector<8x128xf32> to vector<8xf32>
    %15 = vector.shape_cast %14 : vector<8xf32> to vector<8x1xf32>
    %cst_11 = arith.constant 5.000000e-02 : f32
    %16 = vector.broadcast %cst_11 : f32 to vector<8x1xf32>
    %17 = arith.mulf %12, %16 : vector<8x1xf32>
    %cst_12 = arith.constant 5.000000e-02 : f32
    %18 = vector.broadcast %cst_12 : f32 to vector<8x1xf32>
    %19 = arith.mulf %15, %18 : vector<8x1xf32>
    %20 = arith.mulf %17, %17 : vector<8x1xf32>
    %21 = arith.subf %19, %20 : vector<8x1xf32>
    %cst_13 = arith.constant 0.000000e+00 : f32
    %22 = vector.broadcast %cst_13 : f32 to vector<8x1xf32>
    %23 = arith.maximumf %21, %22 : vector<8x1xf32>
    %24 = vector.broadcast %17 : vector<8x1xf32> to vector<8x128xf32>
    %25 = arith.subf %10, %24 : vector<8x128xf32>
    %cst_14 = arith.constant 9.99999974E-6 : f32
    %26 = vector.broadcast %cst_14 : f32 to vector<8x1xf32>
    %27 = arith.addf %23, %26 : vector<8x1xf32>
    %28 = math.rsqrt %27 : vector<8x1xf32>
    %29 = vector.broadcast %28 : vector<8x1xf32> to vector<8x128xf32>
    %30 = arith.mulf %25, %29 : vector<8x128xf32>
    %c0_15 = arith.constant 0 : index
    %c0_16 = arith.constant 0 : index
    %31 = vector.load %arg3[%c0_15, %c0_16] : memref<128x128xf32, #tpu.memory_space<vmem>>, vector<128x128xf32>
    %cst_17 = arith.constant dense<0.000000e+00> : vector<8x128xf32>
    %32 = tpu.matmul %30, %31, %cst_17 {dimension_numbers = #tpu.dot_dimension_numbers<[1], [0], [0], [1], [0, 0, 1, 1], [], []>} : vector<8x128xf32>, vector<128x128xf32>, vector<8x128xf32> -> vector<8x128xf32>
    %33 = vector.broadcast %1 : vector<1x128xf32> to vector<8x128xf32>
    %34 = arith.addf %32, %33 : vector<8x128xf32>
    %cst_18 = arith.constant 0.000000e+00 : f32
    %35 = vector.broadcast %cst_18 : f32 to vector<8x128xf32>
    %36 = arith.maximumf %34, %35 : vector<8x128xf32>
    %cst_19 = arith.constant dense<0.000000e+00> : vector<8xf32>
    %37 = vector.multi_reduction <add>, %36, %cst_19 [1] : vector<8x128xf32> to vector<8xf32>
    %38 = vector.shape_cast %37 : vector<8xf32> to vector<8x1xf32>
    %39 = arith.mulf %36, %36 : vector<8x128xf32>
    %cst_20 = arith.constant dense<0.000000e+00> : vector<8xf32>
    %40 = vector.multi_reduction <add>, %39, %cst_20 [1] : vector<8x128xf32> to vector<8xf32>
    %41 = vector.shape_cast %40 : vector<8xf32> to vector<8x1xf32>
    %cst_21 = arith.constant 5.000000e-02 : f32
    %42 = vector.broadcast %cst_21 : f32 to vector<8x1xf32>
    %43 = arith.mulf %38, %42 : vector<8x1xf32>
    %cst_22 = arith.constant 5.000000e-02 : f32
    %44 = vector.broadcast %cst_22 : f32 to vector<8x1xf32>
    %45 = arith.mulf %41, %44 : vector<8x1xf32>
    %46 = arith.mulf %43, %43 : vector<8x1xf32>
    %47 = arith.subf %45, %46 : vector<8x1xf32>
    %cst_23 = arith.constant 0.000000e+00 : f32
    %48 = vector.broadcast %cst_23 : f32 to vector<8x1xf32>
    %49 = arith.maximumf %47, %48 : vector<8x1xf32>
    %50 = vector.broadcast %43 : vector<8x1xf32> to vector<8x128xf32>
    %51 = arith.subf %36, %50 : vector<8x128xf32>
    %cst_24 = arith.constant 9.99999974E-6 : f32
    %52 = vector.broadcast %cst_24 : f32 to vector<8x1xf32>
    %53 = arith.addf %49, %52 : vector<8x1xf32>
    %54 = math.rsqrt %53 : vector<8x1xf32>
    %55 = vector.broadcast %54 : vector<8x1xf32> to vector<8x128xf32>
    %56 = arith.mulf %51, %55 : vector<8x128xf32>
    %c0_25 = arith.constant 0 : index
    %c0_26 = arith.constant 0 : index
    %57 = vector.load %arg4[%c0_25, %c0_26] : memref<128x128xf32, #tpu.memory_space<vmem>>, vector<128x128xf32>
    %cst_27 = arith.constant dense<0.000000e+00> : vector<8x128xf32>
    %58 = tpu.matmul %56, %57, %cst_27 {dimension_numbers = #tpu.dot_dimension_numbers<[1], [0], [0], [1], [0, 0, 1, 1], [], []>} : vector<8x128xf32>, vector<128x128xf32>, vector<8x128xf32> -> vector<8x128xf32>
    %59 = vector.broadcast %2 : vector<1x128xf32> to vector<8x128xf32>
    %60 = arith.addf %58, %59 : vector<8x128xf32>
    %61 = math.tanh %60 : vector<8x128xf32>
    %62 = vector.broadcast %3 : vector<1x128xf32> to vector<8x128xf32>
    %63 = arith.mulf %61, %62 : vector<8x128xf32>
    %c0_28 = arith.constant 0 : index
    %c0_29 = arith.constant 0 : index
    %64 = vector.load %arg6[%c0_28, %c0_29] : memref<8x128xf32, #tpu.memory_space<vmem>>, vector<8x128xf32>
    tpu.vector_store %arg6[%c0_28, %c0_29], %63 {strides = array<i32>} : memref<8x128xf32, #tpu.memory_space<vmem>>, vector<8x128xf32>,
    return
  }
  func.func @transform_0(%arg0: i32) -> (i32, i32) {
    %c0_i32 = arith.constant 0 : i32
    %c0_i32_0 = arith.constant 0 : i32
    return %arg0, %c0_i32 : i32, i32
  }
  func.func @transform_1(%arg0: i32) -> (i32, i32) {
    %c0_i32 = arith.constant 0 : i32
    %c0_i32_0 = arith.constant 0 : i32
    %c0_i32_1 = arith.constant 0 : i32
    return %c0_i32, %c0_i32_0 : i32, i32
  }
  func.func @transform_2(%arg0: i32) -> (i32, i32) {
    %c0_i32 = arith.constant 0 : i32
    %c0_i32_0 = arith.constant 0 : i32
    %c0_i32_1 = arith.constant 0 : i32
    return %c0_i32, %c0_i32_0 : i32, i32
  }
  func.func @transform_3(%arg0: i32) -> (i32, i32) {
    %c0_i32 = arith.constant 0 : i32
    %c0_i32_0 = arith.constant 0 : i32
    %c0_i32_1 = arith.constant 0 : i32
    return %c0_i32, %c0_i32_0 : i32, i32
  }
  func.func @transform_4(%arg0: i32) -> (i32, i32) {
    %c0_i32 = arith.constant 0 : i32
    %c0_i32_0 = arith.constant 0 : i32
    %c0_i32_1 = arith.constant 0 : i32
    return %c0_i32, %c0_i32_0 : i32, i32
  }
  func.func @transform_5(%arg0: i32) -> (i32, i32) {
    %c0_i32 = arith.constant 0 : i32
    %c0_i32_0 = arith.constant 0 : i32
    return %arg0, %c0_i32 : i32, i32
  }
}

</mosaic_0001>

<llo_original>
// kernel: actor_net_forward.1
$region0: #{actor_net_forward.1}
  #allocation0 [shape = 'u32[]', space=smem, size = 0x4, offset = 0x4, fixed_abs, tag = 'smem constant byte address 0x4 - core index']
  #allocation1 [shape = 'u32[144,128]{1,0:T(1,128)}', space=vmem, size = 0x12000, scoped, tag = 'internal scratch']
  %s0 = inlined_call_operand.vmem [shape: f32[32,128], index: 0, kind: input, shape index: {}]
  %s1 = inlined_call_operand.hbm [shape: f32[128,128], index: 1, kind: input, shape index: {}]
  %s2 = inlined_call_operand.hbm [shape: f32[128,128], index: 2, kind: input, shape index: {}]
  %s3 = inlined_call_operand.hbm [shape: f32[128,128], index: 3, kind: input, shape index: {}]
  %s4 = inlined_call_operand.vmem [shape: f32[4,128], index: 4, kind: input, shape index: {}]
  %s5 = inlined_call_operand.vmem [shape: f32[32,128], index: 5, kind: output, shape index: {}]
  %s6 = sld [smem:[#allocation0]]
  $region65: #{actor_net_forward.1} parent=0
    _
  %s8 = ssub.s32 1, %s6
  %s9 = scalar_select 0, %s8, %s6
  $region1: #{actor_net_forward.1} parent=0
    #allocation2 [shape = 'u8[65536]{0}', space=vmem, size = 0x10000, scoped, tag = 'input window, operand 1, single buffered']
    #allocation3 [shape = 's32[2]{0}', space=sflag, size = 0x8, scoped, tag = 'scoped memory for actor_net_forward.1']
    #allocation4 [shape = 'u8[65536]{0}', space=vmem, size = 0x10000, scoped, tag = 'input window, operand 2, single buffered']
    #allocation5 [shape = 's32[1]{0}', space=sflag, size = 0x4, scoped, tag = 'scoped memory for actor_net_forward.1']
    #allocation6 [shape = 'u8[65536]{0}', space=vmem, size = 0x10000, scoped, tag = 'input window, operand 3, single buffered']
    %10 = vsyncpa [#allocation3], 0
    %11 = vsyncpa [#allocation5], 0
    loop: start=0, step=1, limit=6
    $region2: #{actor_net_forward.1} parent=1 // loop_pre_header
      _
    $region3: #{actor_net_forward.1} parent=1 // loop_header
      %s13 = sphi 0, %s17
      %p14 = scmp.ge.s32.totalorder %s13, 6
      %s23 = sphi 0, %s25
      %s26 = sphi 0, %s23
      %s27 = sphi 0, %s26
      %s43 = sphi 0, %s27
      %s47 = sphi 0, %s47
      %s49 = sphi 0, %s47
      %s50 = sphi 0, %s49
      %s64 = sphi 0, %s50
      %s68 = sphi 0, %s68
      %s70 = sphi 0, %s68
      %s71 = sphi 0, %s70
      %s85 = sphi 0, %s71
      %s89 = sphi 0, %s89
      %s91 = sphi 0, %s89
      %s92 = sphi 0, %s91
      %s106 = sphi 0, %s92
      %s110 = sphi 0, %s110
      %s112 = sphi 0, %s110
      %s113 = sphi 0, %s112
      %s127 = sphi 0, %s113
      %s133 = sphi 0, %s135
      %s136 = sphi 0, %s133
      %s137 = sphi 0, %s136
      %s153 = sphi 0, %s137
    $region4: #{actor_net_forward.1} parent=1 // loop_header_branch
      %16 = sbr.rel (%p14) target = $region8
    $region5: #{actor_net_forward.1} parent=1 // loop_body
      %s18 = ssub.s32 %s13, 1
      %s19 = ssub.s32 %s13, 2
      %s20 = sadd.s32 %s13, 1
      %s21 = ssub.s32 %s13, %s20
      %p22 = scmp.eq.s32.totalorder %s21, 0
      %s24 = sadd.s32 %s23, 1
      %s25 = scalar_select %p22, %s23, %s24
      %p28 = pneg %p22
      %p29 = scmp.eq.s32.totalorder %s13, 3
      %p30 = por %p28, %p29
      %p31 = scmp.ne.s32.totalorder %s23, %s26
      %p32 = scmp.eq.s32.totalorder %s13, 0
      %p33 = por %p31, %p32
      %p34 = scmp.ne.s32.totalorder %s23, %s26
      %p35 = scmp.eq.s32.totalorder %s18, 3
      %p36 = por %p34, %p35
      %p37 = scmp.ne.s32.totalorder %s26, %s27
      %p38 = scmp.eq.s32.totalorder %s18, 0
      %p39 = por %p37, %p38
      %p40 = scmp.ne.s32.totalorder %s26, %s27
      %p41 = scmp.eq.s32.totalorder %s19, 3
      %p42 = por %p40, %p41
      %p44 = scmp.ne.s32.totalorder %s27, %s43
      %p45 = scmp.eq.s32.totalorder %s19, 0
      %p46 = por %p44, %p45
      %s48 = sadd.s32 %s47, 1
      %p51 = scmp.eq.s32.totalorder %s13, 3
      %p52 = scmp.ne.s32.totalorder %s47, %s49
      %p53 = scmp.eq.s32.totalorder %s13, 0
      %p54 = por %p52, %p53
      %p55 = scmp.ne.s32.totalorder %s47, %s49
      %p56 = scmp.eq.s32.totalorder %s18, 3
      %p57 = por %p55, %p56
      %p58 = scmp.ne.s32.totalorder %s49, %s50
      %p59 = scmp.eq.s32.totalorder %s18, 0
      %p60 = por %p58, %p59
      %p61 = scmp.ne.s32.totalorder %s49, %s50
      %p62 = scmp.eq.s32.totalorder %s19, 3
      %p63 = por %p61, %p62
      %p65 = scmp.ne.s32.totalorder %s50, %s64
      %p66 = scmp.eq.s32.totalorder %s19, 0
      %p67 = por %p65, %p66
      %s69 = sadd.s32 %s68, 1
      %p72 = scmp.eq.s32.totalorder %s13, 3
      %p73 = scmp.ne.s32.totalorder %s68, %s70
      %p74 = scmp.eq.s32.totalorder %s13, 0
      %p75 = por %p73, %p74
      %p76 = scmp.ne.s32.totalorder %s68, %s70
      %p77 = scmp.eq.s32.totalorder %s18, 3
      %p78 = por %p76, %p77
      %p79 = scmp.ne.s32.totalorder %s70, %s71
      %p80 = scmp.eq.s32.totalorder %s18, 0
      %p81 = por %p79, %p80
      %p82 = scmp.ne.s32.totalorder %s70, %s71
      %p83 = scmp.eq.s32.totalorder %s19, 3
      %p84 = por %p82, %p83
      %p86 = scmp.ne.s32.totalorder %s71, %s85
      %p87 = scmp.eq.s32.totalorder %s19, 0
      %p88 = por %p86, %p87
      %s90 = sadd.s32 %s89, 1
      %p93 = scmp.eq.s32.totalorder %s13, 3
      %p94 = scmp.ne.s32.totalorder %s89, %s91
      %p95 = scmp.eq.s32.totalorder %s13, 0
      %p96 = por %p94, %p95
      %p97 = scmp.ne.s32.totalorder %s89, %s91
      %p98 = scmp.eq.s32.totalorder %s18, 3
      %p99 = por %p97, %p98
      %p100 = scmp.ne.s32.totalorder %s91, %s92
      %p101 = scmp.eq.s32.totalorder %s18, 0
      %p102 = por %p100, %p101
      %p103 = scmp.ne.s32.totalorder %s91, %s92
      %p104 = scmp.eq.s32.totalorder %s19, 3
      %p105 = por %p103, %p104
      %p107 = scmp.ne.s32.totalorder %s92, %s106
      %p108 = scmp.eq.s32.totalorder %s19, 0
      %p109 = por %p107, %p108
      %s111 = sadd.s32 %s110, 1
      %p114 = scmp.eq.s32.totalorder %s13, 3
      %p115 = scmp.ne.s32.totalorder %s110, %s112
      %p116 = scmp.eq.s32.totalorder %s13, 0
      %p117 = por %p115, %p116
      %p118 = scmp.ne.s32.totalorder %s110, %s112
      %p119 = scmp.eq.s32.totalorder %s18, 3
      %p120 = por %p118, %p119
      %p121 = scmp.ne.s32.totalorder %s112, %s113
      %p122 = scmp.eq.s32.totalorder %s18, 0
      %p123 = por %p121, %p122
      %p124 = scmp.ne.s32.totalorder %s112, %s113
      %p125 = scmp.eq.s32.totalorder %s19, 3
      %p126 = por %p124, %p125
      %p128 = scmp.ne.s32.totalorder %s113, %s127
      %p129 = scmp.eq.s32.totalorder %s19, 0
      %p130 = por %p128, %p129
      %s131 = ssub.s32 %s13, %s20
      %p132 = scmp.eq.s32.totalorder %s131, 0
      %s134 = sadd.s32 %s133, 1
      %s135 = scalar_select %p132, %s133, %s134
      %p138 = pneg %p132
      %p139 = scmp.eq.s32.totalorder %s13, 3
      %p140 = por %p138, %p139
      %p141 = scmp.ne.s32.totalorder %s133, %s136
      %p142 = scmp.eq.s32.totalorder %s13, 0
      %p143 = por %p141, %p142
      %p144 = scmp.ne.s32.totalorder %s133, %s136
      %p145 = scmp.eq.s32.totalorder %s18, 3
      %p146 = por %p144, %p145
      %p147 = scmp.ne.s32.totalorder %s136, %s137
      %p148 = scmp.eq.s32.totalorder %s18, 0
      %p149 = por %p147, %p148
      %p150 = scmp.ne.s32.totalorder %s136, %s137
      %p151 = scmp.eq.s32.totalorder %s19, 3
      %p152 = por %p150, %p151
      %p154 = scmp.ne.s32.totalorder %s137, %s153
      %p155 = scmp.eq.s32.totalorder %s19, 0
      %p156 = por %p154, %p155
      %p157 = scmp.le.s32.totalorder 1, %s13
      %p158 = scmp.lt.s32.totalorder %s13, 5
      %p159 = pnand %p157, %p158
      %p160 = pneg %p159
      // Predicated region
      $region9: #{actor_net_forward.1} parent=5 // pred_check
        _
      $region10: #{actor_net_forward.1} parent=5 // pred_check_branch
        %162 = sbr.rel (%p159) target = $region12
      $region11: #{actor_net_forward.1} parent=5 // pred_region
        %s163 = ssub.s32 %s13, 1
        // Predicated region
        $region13: #{actor_net_forward.1} parent=11 // pred_check
          %p164 = pneg %p60
        $region14: #{actor_net_forward.1} parent=11 // pred_check_branch
          %166 = sbr.rel (%p164) target = $region16
        $region15: #{actor_net_forward.1} parent=11 // pred_region
          %s168 = ssub.s32 2048, 2048
          %169 = vsyncadd [#allocation3], %s168
          %s170 = sshll.u32 [#allocation2], 4
          %s171 = int_to_ptr.vmem [resolvable:$true] %s170
          %176 = dma.hbm_to_vmem [thread:$0]  %s1, 2048, %s171, [#allocation3], 128, 128, 8
        $region16: #{actor_net_forward.1} parent=11 // pred_fallthru
          _
        // Predicated region
        $region17: #{actor_net_forward.1} parent=11 // pred_check
          %p177 = pneg %p81
        $region18: #{actor_net_forward.1} parent=11 // pred_check_branch
          %179 = sbr.rel (%p177) target = $region20
        $region19: #{actor_net_forward.1} parent=11 // pred_region
          %s181 = ssub.s32 2048, 2048
          %182 = vsyncadd [#allocation5], %s181
          %s183 = sshll.u32 [#allocation4], 4
          %s184 = int_to_ptr.vmem [resolvable:$true] %s183
          %189 = dma.hbm_to_vmem [thread:$0]  %s2, 2048, %s184, [#allocation5], 128, 128, 8
        $region20: #{actor_net_forward.1} parent=11 // pred_fallthru
          _
        // Predicated region
        $region21: #{actor_net_forward.1} parent=11 // pred_check
          %p190 = pneg %p102
        $region22: #{actor_net_forward.1} parent=11 // pred_check_branch
          %192 = sbr.rel (%p190) target = $region24
        $region23: #{actor_net_forward.1} parent=11 // pred_region
          %s194 = ssub.s32 2048, 2048
          %195 = vsyncadd [#allocation5], %s194
          %s196 = sshll.u32 [#allocation6], 4
          %s197 = int_to_ptr.vmem [resolvable:$true] %s196
          %202 = dma.hbm_to_vmem [thread:$0]  %s3, 2048, %s197, [#allocation5], 128, 128, 8
        $region24: #{actor_net_forward.1} parent=11 // pred_fallthru
          _
        // Predicated region
        $region25: #{actor_net_forward.1} parent=11 // pred_check
          %p203 = pneg %p123
        $region26: #{actor_net_forward.1} parent=11 // pred_check_branch
          %205 = sbr.rel (%p203) target = $region28
        $region27: #{actor_net_forward.1} parent=11 // pred_region
          _
        $region28: #{actor_net_forward.1} parent=11 // pred_fallthru
          _
      $region12: #{actor_net_forward.1} parent=5 // pred_fallthru
        _
      %p206 = scmp.lt.s32.totalorder %s13, 4
      // Predicated region
      $region29: #{actor_net_forward.1} parent=5 // pred_check
        %p207 = pneg %p206
      $region30: #{actor_net_forward.1} parent=5 // pred_check_branch
        %209 = sbr.rel (%p207) target = $region32
      $region31: #{actor_net_forward.1} parent=5 // pred_region
        // Predicated region
        $region33: #{actor_net_forward.1} parent=31 // pred_check
          %p210 = pneg %p33
        $region34: #{actor_net_forward.1} parent=31 // pred_check_branch
          %212 = sbr.rel (%p210) target = $region36
        $region35: #{actor_net_forward.1} parent=31 // pred_region
          %p213 = scmp.lt.s32.totalorder %s13, 3
          %s214 = scalar_select %p213, %s13, 3
          %s215 = smul.addr %s214, 8
          %s216 = scalar_lea.vmem %s0, %s215
        $region36: #{actor_net_forward.1} parent=31 // pred_fallthru
          _
      $region32: #{actor_net_forward.1} parent=5 // pred_fallthru
        _
      %p217 = scmp.le.s32.totalorder 1, %s13
      %p218 = scmp.lt.s32.totalorder %s13, 5
      %p219 = pnand %p217, %p218
      %p220 = pneg %p219
      // Predicated region
      $region37: #{actor_net_forward.1} parent=5 // pred_check
        _
      $region38: #{actor_net_forward.1} parent=5 // pred_check_branch
        %222 = sbr.rel (%p219) target = $region40
      $region39: #{actor_net_forward.1} parent=5 // pred_region
        %s223 = ssub.s32 %s13, 1
        // Predicated region
        $region41: #{actor_net_forward.1} parent=39 // pred_check
          %p224 = pneg %p60
        $region42: #{actor_net_forward.1} parent=39 // pred_check_branch
          %226 = sbr.rel (%p224) target = $region44
        $region43: #{actor_net_forward.1} parent=39 // pred_region
          %227 = dma.done [#allocation3], 2048
        $region44: #{actor_net_forward.1} parent=39 // pred_fallthru
          _
        // Predicated region
        $region45: #{actor_net_forward.1} parent=39 // pred_check
          %p228 = pneg %p81
        $region46: #{actor_net_forward.1} parent=39 // pred_check_branch
          %230 = sbr.rel (%p228) target = $region48
        $region47: #{actor_net_forward.1} parent=39 // pred_region
          %231 = dma.done [#allocation5], 2048
        $region48: #{actor_net_forward.1} parent=39 // pred_fallthru
          _
        // Predicated region
        $region49: #{actor_net_forward.1} parent=39 // pred_check
          %p232 = pneg %p102
        $region50: #{actor_net_forward.1} parent=39 // pred_check_branch
          %234 = sbr.rel (%p232) target = $region52
        $region51: #{actor_net_forward.1} parent=39 // pred_region
          %235 = dma.done [#allocation5], 2048
        $region52: #{actor_net_forward.1} parent=39 // pred_fallthru
          _
        %p236 = scmp.lt.s32.totalorder %s18, 3
        %s237 = scalar_select %p236, %s18, 3
        %s238 = smul.addr %s237, 8
        %s239 = scalar_lea.vmem %s0, %s238
        %p240 = pneg %p39
        %p241 = pneg %p36
        %p242 = pneg %p60
        %p243 = pneg %p57
        %p244 = pneg %p81
        %p245 = pneg %p78
        %p246 = pneg %p102
        %p247 = pneg %p99
        %p248 = pneg %p123
        %p249 = pneg %p120
        %p250 = pneg %p149
        %p251 = pneg %p146
        %p252 = scmp.lt.s32.totalorder %s18, 3
        %s253 = scalar_select %p252, %s18, 3
        %s254 = smul.addr %s253, 8
        %s255 = scalar_lea.vmem %s5, %s254
        %p256 = scmp.lt.s32.totalorder %s18, 3
        %s257 = scalar_select %p256, %s18, 3
        %s258 = smul.addr %s257, 8
        %s259 = scalar_lea.vmem %s0, %s258
        %p260 = scmp.lt.s32.totalorder %s18, 3
        %s261 = scalar_select %p260, %s18, 3
        %s262 = smul.addr %s261, 8
        %s263 = scalar_lea.vmem %s5, %s262
        %v264 = vld [vmem:[%s4] sm:$0x1]
        %v265 = vld [vmem:[%s4 + $0x1] sm:$0x1]
        %v266 = vld [vmem:[%s4 + $0x2] sm:$0x1]
        %v267 = vld [vmem:[%s4 + $0x3] sm:$0x1]
        %v268 = vld [vmem:[%s259] sm:$0xff]
        %v269 = vld [vmem:[#allocation2] sm:$0xff]
        %v270 = vld [vmem:[#allocation2 + $0x8] sm:$0xff]
        %v271 = vld [vmem:[#allocation2 + $0x10] sm:$0xff]
        %v272 = vld [vmem:[#allocation2 + $0x18] sm:$0xff]
        %v273 = vld [vmem:[#allocation2 + $0x20] sm:$0xff]
        %v274 = vld [vmem:[#allocation2 + $0x28] sm:$0xff]
        %v275 = vld [vmem:[#allocation2 + $0x30] sm:$0xff]
        %v276 = vld [vmem:[#allocation2 + $0x38] sm:$0xff]
        %v277 = vld [vmem:[#allocation2 + $0x40] sm:$0xff]
        %v278 = vld [vmem:[#allocation2 + $0x48] sm:$0xff]
        %v279 = vld [vmem:[#allocation2 + $0x50] sm:$0xff]
        %v280 = vld [vmem:[#allocation2 + $0x58] sm:$0xff]
        %v281 = vld [vmem:[#allocation2 + $0x60] sm:$0xff]
        %v282 = vld [vmem:[#allocation2 + $0x68] sm:$0xff]
        %v283 = vld [vmem:[#allocation2 + $0x70] sm:$0xff]
        %v284 = vld [vmem:[#allocation2 + $0x78] sm:$0xff]
        %v285 = vlaneseq
        %v286 = vshrl.u32 %v285, 7
        %v287 = vsub.s32 0, %v286
        %v288 = vrot.slane %v264, %v287
        %289 = vmatprep.subr.mxu0 0.0
        %290 = vmatpush1.msra.mxu0 %v269
        %291 = vmatprep.subr.mxu0 0.0
        %292 = vmatpush1.msra.mxu0 %v270
        %293 = vmatprep.subr.mxu0 0.0
        %294 = vmatpush1.msra.mxu0 %v271
        %295 = vmatprep.subr.mxu0 0.0
        %296 = vmatpush1.msra.mxu0 %v272
        %297 = vmatprep.subr.mxu0 0.0
        %298 = vmatpush1.msra.mxu0 %v273
        %299 = vmatprep.subr.mxu0 0.0
        %300 = vmatpush1.msra.mxu0 %v274
        %301 = vmatprep.subr.mxu0 0.0
        %302 = vmatpush1.msra.mxu0 %v275
        %303 = vmatprep.subr.mxu0 0.0
        %304 = vmatpush1.msra.mxu0 %v276
        %305 = vmatprep.subr.mxu0 0.0
        %306 = vmatpush1.msra.mxu0 %v277
        %307 = vmatprep.subr.mxu0 0.0
        %308 = vmatpush1.msra.mxu0 %v278
        %309 = vmatprep.subr.mxu0 0.0
        %310 = vmatpush1.msra.mxu0 %v279
        %311 = vmatprep.subr.mxu0 0.0
        %312 = vmatpush1.msra.mxu0 %v280
        %313 = vmatprep.subr.mxu0 0.0
        %314 = vmatpush1.msra.mxu0 %v281
        %315 = vmatprep.subr.mxu0 0.0
        %316 = vmatpush1.msra.mxu0 %v282
        %317 = vmatprep.subr.mxu0 0.0
        %318 = vmatpush1.msra.mxu0 %v283
        %319 = vmatprep.subr.mxu0 0.0
        %320 = vmatpush1.msra.mxu0 %v284
        %321 = vmatprep.subr.mxu0 0.0
        %322 = vmatpush1.msra.mxu0 0.0
        %323 = vmatprep.subr.mxu0 0.0
        %324 = vmatpush1.msra.mxu0 0.0
        %325 = vmatprep.subr.mxu0 0.0
        %326 = vmatpush1.msra.mxu0 0.0
        %327 = vmatprep.subr.mxu0 0.0
        %328 = vmatpush1.msra.mxu0 0.0
        %329 = vmatprep.subr.mxu0 0.0
        %330 = vmatpush1.msra.mxu0 0.0
        %331 = vmatprep.subr.mxu0 0.0
        %332 = vmatpush1.msra.mxu0 0.0
        %333 = vmatprep.subr.mxu0 0.0
        %334 = vmatpush1.msra.mxu0 0.0
        %335 = vmatprep.subr.mxu0 0.0
        %336 = vmatpush1.msra.mxu0 0.0
        %337 = vmatprep.subr.mxu0 0.0
        %338 = vmatpush1.msra.mxu0 0.0
        %339 = vmatprep.subr.mxu0 0.0
        %340 = vmatpush1.msra.mxu0 0.0
        %341 = vmatprep.subr.mxu0 0.0
        %342 = vmatpush1.msra.mxu0 0.0
        %343 = vmatprep.subr.mxu0 0.0
        %344 = vmatpush1.msra.mxu0 0.0
        %345 = vmatprep.subr.mxu0 0.0
        %346 = vmatpush1.msra.mxu0 0.0
        %347 = vmatprep.subr.mxu0 0.0
        %348 = vmatpush1.msra.mxu0 0.0
        %349 = vmatprep.subr.mxu0 0.0
        %350 = vmatpush1.msra.mxu0 0.0
        %351 = vmatprep.subr.mxu0 0.0
        %352 = vmatpush1.msra.mxu0 0.0
        %353 = vmatprep.mubr.f32.mxu0 0.0
        %354 = vmatmul.mubr.f32.gmra.mrb[0].mxu0 %v268
        %v355 = vpop.f32.mrb[0].mxu0
        %v356 = vadd.f32 %v288, %v355
        %v357 = vpop.f32.mrb[0].mxu0
        %358 = vdwg.mxu0
        %v359 = vmax.f32 %v356, 0.0
        %360 = vadd.xlane.f32.xlu0 %v359
        %v361 = vpop.xlane.xlu0 %360
        %v362 = vmul.f32 %v359, %v359
        %363 = vadd.xlane.f32.xlu0 %v362
        %v364 = vpop.xlane.xlu0 %363
        %v365 = vmul.f32 %v361, 0.05
        %v366 = vmul.f32 %v364, 0.05
        %v367 = vmul.f32 %v365, %v365
        %v368 = vsub.f32 %v366, %v367
        %v369 = vmax.f32 %v368, 0.0
        %v370 = vsub.f32 %v359, %v365
        %v371 = vadd.f32 %v369, 1e-05
        %v372 = vrsqrt.pop %v371
        %v373 = vmul.f32 %v370, %v372
        %v374 = vld [vmem:[#allocation4] sm:$0xff]
        %v375 = vld [vmem:[#allocation4 + $0x8] sm:$0xff]
        %v376 = vld [vmem:[#allocation4 + $0x10] sm:$0xff]
        %v377 = vld [vmem:[#allocation4 + $0x18] sm:$0xff]
        %v378 = vld [vmem:[#allocation4 + $0x20] sm:$0xff]
        %v379 = vld [vmem:[#allocation4 + $0x28] sm:$0xff]
        %v380 = vld [vmem:[#allocation4 + $0x30] sm:$0xff]
        %v381 = vld [vmem:[#allocation4 + $0x38] sm:$0xff]
        %v382 = vld [vmem:[#allocation4 + $0x40] sm:$0xff]
        %v383 = vld [vmem:[#allocation4 + $0x48] sm:$0xff]
        %v384 = vld [vmem:[#allocation4 + $0x50] sm:$0xff]
        %v385 = vld [vmem:[#allocation4 + $0x58] sm:$0xff]
        %v386 = vld [vmem:[#allocation4 + $0x60] sm:$0xff]
        %v387 = vld [vmem:[#allocation4 + $0x68] sm:$0xff]
        %v388 = vld [vmem:[#allocation4 + $0x70] sm:$0xff]
        %v389 = vld [vmem:[#allocation4 + $0x78] sm:$0xff]
        %v390 = vlaneseq
        %v391 = vshrl.u32 %v390, 7
        %v392 = vsub.s32 0, %v391
        %v393 = vrot.slane %v265, %v392
        %394 = vmatprep.subr.mxu0 0.0
        %395 = vmatpush1.msra.mxu0 %v374
        %396 = vmatprep.subr.mxu0 0.0
        %397 = vmatpush1.msra.mxu0 %v375
        %398 = vmatprep.subr.mxu0 0.0
        %399 = vmatpush1.msra.mxu0 %v376
        %400 = vmatprep.subr.mxu0 0.0
        %401 = vmatpush1.msra.mxu0 %v377
        %402 = vmatprep.subr.mxu0 0.0
        %403 = vmatpush1.msra.mxu0 %v378
        %404 = vmatprep.subr.mxu0 0.0
        %405 = vmatpush1.msra.mxu0 %v379
        %406 = vmatprep.subr.mxu0 0.0
        %407 = vmatpush1.msra.mxu0 %v380
        %408 = vmatprep.subr.mxu0 0.0
        %409 = vmatpush1.msra.mxu0 %v381
        %410 = vmatprep.subr.mxu0 0.0
        %411 = vmatpush1.msra.mxu0 %v382
        %412 = vmatprep.subr.mxu0 0.0
        %413 = vmatpush1.msra.mxu0 %v383
        %414 = vmatprep.subr.mxu0 0.0
        %415 = vmatpush1.msra.mxu0 %v384
        %416 = vmatprep.subr.mxu0 0.0
        %417 = vmatpush1.msra.mxu0 %v385
        %418 = vmatprep.subr.mxu0 0.0
        %419 = vmatpush1.msra.mxu0 %v386
        %420 = vmatprep.subr.mxu0 0.0
        %421 = vmatpush1.msra.mxu0 %v387
        %422 = vmatprep.subr.mxu0 0.0
        %423 = vmatpush1.msra.mxu0 %v388
        %424 = vmatprep.subr.mxu0 0.0
        %425 = vmatpush1.msra.mxu0 %v389
        %426 = vmatprep.subr.mxu0 0.0
        %427 = vmatpush1.msra.mxu0 0.0
        %428 = vmatprep.subr.mxu0 0.0
        %429 = vmatpush1.msra.mxu0 0.0
        %430 = vmatprep.subr.mxu0 0.0
        %431 = vmatpush1.msra.mxu0 0.0
        %432 = vmatprep.subr.mxu0 0.0
        %433 = vmatpush1.msra.mxu0 0.0
        %434 = vmatprep.subr.mxu0 0.0
        %435 = vmatpush1.msra.mxu0 0.0
        %436 = vmatprep.subr.mxu0 0.0
        %437 = vmatpush1.msra.mxu0 0.0
        %438 = vmatprep.subr.mxu0 0.0
        %439 = vmatpush1.msra.mxu0 0.0
        %440 = vmatprep.subr.mxu0 0.0
        %441 = vmatpush1.msra.mxu0 0.0
        %442 = vmatprep.subr.mxu0 0.0
        %443 = vmatpush1.msra.mxu0 0.0
        %444 = vmatprep.subr.mxu0 0.0
        %445 = vmatpush1.msra.mxu0 0.0
        %446 = vmatprep.subr.mxu0 0.0
        %447 = vmatpush1.msra.mxu0 0.0
        %448 = vmatprep.subr.mxu0 0.0
        %449 = vmatpush1.msra.mxu0 0.0
        %450 = vmatprep.subr.mxu0 0.0
        %451 = vmatpush1.msra.mxu0 0.0
        %452 = vmatprep.subr.mxu0 0.0
        %453 = vmatpush1.msra.mxu0 0.0
        %454 = vmatprep.subr.mxu0 0.0
        %455 = vmatpush1.msra.mxu0 0.0
        %456 = vmatprep.subr.mxu0 0.0
        %457 = vmatpush1.msra.mxu0 0.0
        %458 = vmatprep.mubr.f32.mxu0 0.0
        %459 = vmatmul.mubr.f32.gmra.mrb[0].mxu0 %v373
        %v460 = vpop.f32.mrb[0].mxu0
        %v461 = vadd.f32 %v393, %v460
        %v462 = vpop.f32.mrb[0].mxu0
        %463 = vdwg.mxu0
        %v464 = vmax.f32 %v461, 0.0
        %465 = vadd.xlane.f32.xlu0 %v464
        %v466 = vpop.xlane.xlu0 %465
        %v467 = vmul.f32 %v464, %v464
        %468 = vadd.xlane.f32.xlu0 %v467
        %v469 = vpop.xlane.xlu0 %468
        %v470 = vmul.f32 %v466, 0.05
        %v471 = vmul.f32 %v469, 0.05
        %v472 = vmul.f32 %v470, %v470
        %v473 = vsub.f32 %v471, %v472
        %v474 = vmax.f32 %v473, 0.0
        %v475 = vsub.f32 %v464, %v470
        %v476 = vadd.f32 %v474, 1e-05
        %v477 = vrsqrt.pop %v476
        %v478 = vmul.f32 %v475, %v477
        %v479 = vld [vmem:[#allocation6] sm:$0xff]
        %v480 = vld [vmem:[#allocation6 + $0x8] sm:$0xff]
        %v481 = vld [vmem:[#allocation6 + $0x10] sm:$0xff]
        %v482 = vld [vmem:[#allocation6 + $0x18] sm:$0xff]
        %v483 = vld [vmem:[#allocation6 + $0x20] sm:$0xff]
        %v484 = vld [vmem:[#allocation6 + $0x28] sm:$0xff]
        %v485 = vld [vmem:[#allocation6 + $0x30] sm:$0xff]
        %v486 = vld [vmem:[#allocation6 + $0x38] sm:$0xff]
        %v487 = vld [vmem:[#allocation6 + $0x40] sm:$0xff]
        %v488 = vld [vmem:[#allocation6 + $0x48] sm:$0xff]
        %v489 = vld [vmem:[#allocation6 + $0x50] sm:$0xff]
        %v490 = vld [vmem:[#allocation6 + $0x58] sm:$0xff]
        %v491 = vld [vmem:[#allocation6 + $0x60] sm:$0xff]
        %v492 = vld [vmem:[#allocation6 + $0x68] sm:$0xff]
        %v493 = vld [vmem:[#allocation6 + $0x70] sm:$0xff]
        %v494 = vld [vmem:[#allocation6 + $0x78] sm:$0xff]
        %v495 = vlaneseq
        %v496 = vshrl.u32 %v495, 7
        %v497 = vsub.s32 0, %v496
        %v498 = vrot.slane %v266, %v497
        %499 = vmatprep.subr.mxu0 0.0
        %500 = vmatpush1.msra.mxu0 %v479
        %501 = vmatprep.subr.mxu0 0.0
        %502 = vmatpush1.msra.mxu0 %v480
        %503 = vmatprep.subr.mxu0 0.0
        %504 = vmatpush1.msra.mxu0 %v481
        %505 = vmatprep.subr.mxu0 0.0
        %506 = vmatpush1.msra.mxu0 %v482
        %507 = vmatprep.subr.mxu0 0.0
        %508 = vmatpush1.msra.mxu0 %v483
        %509 = vmatprep.subr.mxu0 0.0
        %510 = vmatpush1.msra.mxu0 %v484
        %511 = vmatprep.subr.mxu0 0.0
        %512 = vmatpush1.msra.mxu0 %v485
        %513 = vmatprep.subr.mxu0 0.0
        %514 = vmatpush1.msra.mxu0 %v486
        %515 = vmatprep.subr.mxu0 0.0
        %516 = vmatpush1.msra.mxu0 %v487
        %517 = vmatprep.subr.mxu0 0.0
        %518 = vmatpush1.msra.mxu0 %v488
        %519 = vmatprep.subr.mxu0 0.0
        %520 = vmatpush1.msra.mxu0 %v489
        %521 = vmatprep.subr.mxu0 0.0
        %522 = vmatpush1.msra.mxu0 %v490
        %523 = vmatprep.subr.mxu0 0.0
        %524 = vmatpush1.msra.mxu0 %v491
        %525 = vmatprep.subr.mxu0 0.0
        %526 = vmatpush1.msra.mxu0 %v492
        %527 = vmatprep.subr.mxu0 0.0
        %528 = vmatpush1.msra.mxu0 %v493
        %529 = vmatprep.subr.mxu0 0.0
        %530 = vmatpush1.msra.mxu0 %v494
        %531 = vmatprep.subr.mxu0 0.0
        %532 = vmatpush1.msra.mxu0 0.0
        %533 = vmatprep.subr.mxu0 0.0
        %534 = vmatpush1.msra.mxu0 0.0
        %535 = vmatprep.subr.mxu0 0.0
        %536 = vmatpush1.msra.mxu0 0.0
        %537 = vmatprep.subr.mxu0 0.0
        %538 = vmatpush1.msra.mxu0 0.0
        %539 = vmatprep.subr.mxu0 0.0
        %540 = vmatpush1.msra.mxu0 0.0
        %541 = vmatprep.subr.mxu0 0.0
        %542 = vmatpush1.msra.mxu0 0.0
        %543 = vmatprep.subr.mxu0 0.0
        %544 = vmatpush1.msra.mxu0 0.0
        %545 = vmatprep.subr.mxu0 0.0
        %546 = vmatpush1.msra.mxu0 0.0
        %547 = vmatprep.subr.mxu0 0.0
        %548 = vmatpush1.msra.mxu0 0.0
        %549 = vmatprep.subr.mxu0 0.0
        %550 = vmatpush1.msra.mxu0 0.0
        %551 = vmatprep.subr.mxu0 0.0
        %552 = vmatpush1.msra.mxu0 0.0
        %553 = vmatprep.subr.mxu0 0.0
        %554 = vmatpush1.msra.mxu0 0.0
        %555 = vmatprep.subr.mxu0 0.0
        %556 = vmatpush1.msra.mxu0 0.0
        %557 = vmatprep.subr.mxu0 0.0
        %558 = vmatpush1.msra.mxu0 0.0
        %559 = vmatprep.subr.mxu0 0.0
        %560 = vmatpush1.msra.mxu0 0.0
        %561 = vmatprep.subr.mxu0 0.0
        %562 = vmatpush1.msra.mxu0 0.0
        %563 = vmatprep.mubr.f32.mxu0 0.0
        %564 = vmatmul.mubr.f32.gmra.mrb[0].mxu0 %v478
        %v565 = vpop.f32.mrb[0].mxu0
        %v566 = vadd.f32 %v498, %v565
        %v567 = vpop.f32.mrb[0].mxu0
        %568 = vdwg.mxu0
        %v569 = vtanh.pop %v566
        %v570 = vlaneseq
        %v571 = vshrl.u32 %v570, 7
        %v572 = vsub.s32 0, %v571
        %v573 = vrot.slane %v267, %v572
        %v574 = vmul.f32 %v569, %v573
        %575 = vst [vmem:[%s263] sm:$0xff] %v574
        %p576 = scmp.lt.s32.totalorder %s18, 3
        %s577 = scalar_select %p576, %s18, 3
        %s578 = smul.addr %s577, 8
        %s579 = scalar_lea.vmem %s5, %s578
        // Predicated region
        $region53: #{actor_net_forward.1} parent=39 // pred_check
          %p580 = pneg %p146
        $region54: #{actor_net_forward.1} parent=39 // pred_check_branch
          %582 = sbr.rel (%p580) target = $region56
        $region55: #{actor_net_forward.1} parent=39 // pred_region
          _
        $region56: #{actor_net_forward.1} parent=39 // pred_fallthru
          _
      $region40: #{actor_net_forward.1} parent=5 // pred_fallthru
        _
      %p583 = scmp.le.s32.totalorder 2, %s13
      // Predicated region
      $region57: #{actor_net_forward.1} parent=5 // pred_check
        %p584 = pneg %p583
      $region58: #{actor_net_forward.1} parent=5 // pred_check_branch
        %586 = sbr.rel (%p584) target = $region60
      $region59: #{actor_net_forward.1} parent=5 // pred_region
        %s587 = ssub.s32 %s13, 2
        // Predicated region
        $region61: #{actor_net_forward.1} parent=59 // pred_check
          %p588 = pneg %p152
        $region62: #{actor_net_forward.1} parent=59 // pred_check_branch
          %590 = sbr.rel (%p588) target = $region64
        $region63: #{actor_net_forward.1} parent=59 // pred_region
          %p591 = scmp.lt.s32.totalorder %s19, 3
          %s592 = scalar_select %p591, %s19, 3
          %s593 = smul.addr %s592, 8
          %s594 = scalar_lea.vmem %s5, %s593
        $region64: #{actor_net_forward.1} parent=59 // pred_fallthru
          _
      $region60: #{actor_net_forward.1} parent=5 // pred_fallthru
        _
    $region6: #{actor_net_forward.1} parent=1 // loop_footer
      %s17 = sadd.s32 1, %s13
    $region7: #{actor_net_forward.1} parent=1 // loop_footer_branch
      %12 = sbr.rel target = $region3
    $region8: #{actor_net_forward.1} parent=1 // loop_exit
      _
    %595 = vsyncpa [#allocation3], 1
    %s596 = scalar_lea.sflag [#allocation3], 1
    %597 = vsyncpa %s596, 1
    %598 = vsyncpa [#allocation5], 1

</llo_original>
